<compile_context>
chip_gen: v5e
topology: v5e:2x2
jax: 0.10.0
libtpu: 0.0.40
codegen_flags: <defaults>
</compile_context>

<pallas_src>
import jax
import jax.numpy as jnp
from jax import lax
from jax.experimental import pallas as pl
from jax.experimental.pallas import tpu as pltpu


def _conv1x1_softmax_kernel(w_ref, b_ref, x_ref, o_ref):
    # w_ref: SMEM (C_out, C_in)        temperature-scaled 1x1-conv weight
    # b_ref: SMEM (C_out,)             temperature-scaled bias
    # x_ref: VMEM (1, C_in, S_BLK, 128)  one batch element, one dense spatial tile
    # o_ref: VMEM (1, C_out, S_BLK, 128) softmax over the channel axis
    c_out, c_in = w_ref.shape
    s_blk = x_ref.shape[2]

    # Chunk the spatial tile so every intermediate stays vreg-resident (no VMEM temporaries).
    ch = 32
    while s_blk % ch:
        ch //= 2
    n_chunks = s_blk // ch

    # Hoist the SMEM scalar loads out of the chunk loop.
    wv = [[w_ref[o, c] for c in range(c_in)] for o in range(c_out)]
    bv = [b_ref[o] for o in range(c_out)]

    # TODO(synk): for C_in*C_out beyond ~16-32 channels, switch the conv to an MXU jnp.dot path;
    # the unrolled VPU FMA ladder below is only the right choice for tiny channel counts.
    def body(t, carry):
        r0 = pl.multiple_of(t * ch, ch)
        xs = [x_ref[0, c, pl.ds(r0, ch), :].astype(jnp.float32) for c in range(c_in)]

        # 1x1 conv as scalar-broadcast FMAs on the VPU (bias folded into the first one).
        zs = []
        for o in range(c_out):
            z = xs[0] * wv[o][0] + bv[o]
            for c in range(1, c_in):
                z = z + xs[c] * wv[o][c]
            zs.append(z)

        # Numerically-stable softmax across the channel slabs — purely elementwise, no XLU.
        m = zs[0]
        for z in zs[1:]:
            m = jnp.maximum(m, z)
        es = [jnp.exp(z - m) for z in zs]
        s = es[0]
        for e in es[1:]:
            s = s + e

        inv = pl.reciprocal(s, approx=True)   # EUP slot (nearly idle here)
        inv = inv * (2.0 - s * inv)           # one Newton step: keeps sum-to-1 within 1e-5

        for o in range(c_out):
            o_ref[0, o, pl.ds(r0, ch), :] = (es[o] * inv).astype(o_ref.dtype)
        return carry

    lax.fori_loop(0, n_chunks, body, 0, unroll=True)


def _pick_s_block(c_in, c_out, in_itemsize, out_itemsize, budget_bytes, s_cap=1024):
    # VMEM per sublane row (128 lanes): double-buffered input + output pipeline blocks.
    # In-kernel intermediates are chunked into vregs and no longer count against VMEM.
    per_s = 128 * 2 * (c_in * in_itemsize + c_out * out_itemsize)
    s_max = int(budget_bytes // per_s)
    return max(8, (min(s_max, s_cap) // 8) * 8)


def apply_softmax_to(x_nchw, weight, bias, *, temperature=1.0, s_block=None, out_dtype=None):
    """Synthetic wrapped model (1x1 conv) + ApplySoftmaxTo fused in one Pallas kernel.

    x_nchw: (N, C_in, H, W); weight: (C_out, C_in); bias: (C_out,).
    Returns {"logits": (N, C_out, H, W)} == softmax(temperature * conv1x1(x), dim=1).
    out_dtype: output dtype (default = input dtype); pass bf16 to halve the write stream.
    s_block: optional spatial tile height in sublanes (one tile covers s_block*128 pixels).
    """
    N, C_in, H, W = x_nchw.shape
    C_out = weight.shape[0]
    HW = H * W
    out_dtype = x_nchw.dtype if out_dtype is None else jnp.dtype(out_dtype)
    in_itemsize = jnp.dtype(x_nchw.dtype).itemsize
    out_itemsize = jnp.dtype(out_dtype).itemsize

    # Fold temperature into the conv parameters: softmax(T*(Wx+b)) == softmax((T*W)x + (T*b)).
    w_t = weight.astype(jnp.float32) * temperature
    b_t = bias.astype(jnp.float32) * temperature

    # Generation-aware VMEM budgeting (128 MiB v5e/v6e, 64 MiB v7x; conservative fallback).
    try:
        vmem_cap = int(pltpu.get_tpu_info().vmem_capacity_bytes)
    except Exception:
        vmem_cap = 64 * 1024 * 1024
    vmem_limit = min((vmem_cap * 3) // 4, 96 * 1024 * 1024)

    # Dense (S, 128) lane layout; pad the flat spatial dim to a lane multiple only when needed
    # (free metadata reshape in the common HW % 128 == 0 case).
    s_raw = -(-HW // 128)
    hw128 = s_raw * 128
    x_flat = x_nchw.reshape(N, C_in, HW)
    if hw128 != HW:
        x_flat = jnp.pad(x_flat, ((0, 0), (0, 0), (0, hw128 - HW)))
    x4 = x_flat.reshape(N, C_in, s_raw, 128)

    auto_block = s_block is None
    if auto_block:
        s_block = _pick_s_block(C_in, C_out, in_itemsize, out_itemsize,
                                (vmem_limit * 4) // 5)
    if s_block >= s_raw:
        s_block = s_raw                         # single block == full dim (any size legal)
    else:
        s_block = max(8, (s_block // 8) * 8)    # tiled blocks: multiple of 8 sublanes

    # v7x has two TensorCores: with a single-batch call, split the spatial axis so the
    # "parallel" grid has at least 2 steps (no-op for v5e/v6e single-TC chips).
    if auto_block and N == 1 and s_block >= s_raw and s_raw > 8:
        s_block = max(8, ((-(-s_raw // 2)) + 7) // 8 * 8)

    n_tiles = -(-s_raw // s_block)  # partial last tile: Pallas masks the out-of-bounds writeback

    cost = pl.CostEstimate(
        flops=int(N * hw128 * (2 * C_in * C_out + 6 * C_out + 4)),
        transcendentals=int(N * hw128 * C_out),
        bytes_accessed=int(N * hw128 * (C_in * in_itemsize + C_out * out_itemsize)),
    )

    out4 = pl.pallas_call(
        _conv1x1_softmax_kernel,
        out_shape=jax.ShapeDtypeStruct((N, C_out, s_raw, 128), out_dtype),
        grid_spec=pltpu.PrefetchScalarGridSpec(
            num_scalar_prefetch=0,
            grid=(N, n_tiles),
            in_specs=[
                pl.BlockSpec(memory_space=pltpu.MemorySpace.SMEM),   # weight (scalars)
                pl.BlockSpec(memory_space=pltpu.MemorySpace.SMEM),   # bias   (scalars)
                pl.BlockSpec((1, C_in, s_block, 128), lambda n, t: (n, 0, t, 0)),
            ],
            out_specs=pl.BlockSpec((1, C_out, s_block, 128), lambda n, t: (n, 0, t, 0)),
        ),
        compiler_params=pltpu.CompilerParams(
            dimension_semantics=("parallel", "parallel"),
            vmem_limit_bytes=int(vmem_limit)),
        cost_estimate=cost,
    )(w_t, b_t, x4)

    if hw128 != HW:
        out = out4.reshape(N, C_out, hw128)[:, :, :HW].reshape(N, C_out, H, W)
    else:
        out = out4.reshape(N, C_out, H, W)
    return {"logits": out}


if __name__ == "__main__":
    # Small shapes consistent with an NCHW segmentation-style model output.
    N, C_in, C_out, H, W = 2, 4, 4, 16, 16
    temperature = 2.0

    key = jax.random.PRNGKey(0)
    kx, kw, kb = jax.random.split(key, 3)
    x = jax.random.normal(kx, (N, C_in, H, W), dtype=jnp.float32)
    # deterministic synthetic 1x1-conv parameters (the wrapped "model")
    weight = jax.random.normal(kw, (C_out, C_in), dtype=jnp.float32) * 0.5
    bias = jax.random.normal(kb, (C_out,), dtype=jnp.float32) * 0.1

    out = apply_softmax_to(x, weight, bias, temperature=temperature)
    probs = jax.block_until_ready(out["logits"])

    # reference check in plain JAX
    logits_ref = jnp.einsum("oc,nchw->nohw", weight, x) + bias[None, :, None, None]
    ref = jax.nn.softmax(logits_ref * temperature, axis=1)
    assert probs.shape == (N, C_out, H, W)
    assert probs.dtype == x.dtype
    assert jnp.allclose(probs, ref, atol=1e-5, rtol=1e-5)
    assert jnp.allclose(jnp.sum(probs, axis=1), 1.0, atol=1e-5)

    # non-128-divisible spatial size -> lane padding + partial-last-tile (masked writeback) path
    H2 = W2 = 36
    x2 = jax.random.normal(kx, (N, C_in, H2, W2), dtype=jnp.float32)
    out2 = apply_softmax_to(x2, weight, bias, temperature=temperature, s_block=8)
    probs2 = jax.block_until_ready(out2["logits"])
    logits_ref2 = jnp.einsum("oc,nchw->nohw", weight, x2) + bias[None, :, None, None]
    ref2 = jax.nn.softmax(logits_ref2 * temperature, axis=1)
    assert probs2.shape == (N, C_out, H2, W2)
    assert jnp.allclose(probs2, ref2, atol=1e-5, rtol=1e-5)
    assert jnp.allclose(jnp.sum(probs2, axis=1), 1.0, atol=1e-5)

    # bf16 I/O path: halves both HBM streams; math stays f32 in-kernel.
    x3 = x.astype(jnp.bfloat16)
    out3 = apply_softmax_to(x3, weight, bias, temperature=temperature,
                            out_dtype=jnp.bfloat16)
    probs3 = jax.block_until_ready(out3["logits"])
    logits_ref3 = (jnp.einsum("oc,nchw->nohw", weight, x3.astype(jnp.float32))
                   + bias[None, :, None, None])
    ref3 = jax.nn.softmax(logits_ref3 * temperature, axis=1)
    assert probs3.dtype == jnp.bfloat16
    assert jnp.allclose(probs3.astype(jnp.float32), ref3, atol=2e-2, rtol=2e-2)
    assert jnp.allclose(jnp.sum(probs3.astype(jnp.float32), axis=1), 1.0, atol=2e-2)

    print("KERNEL_OK")
</pallas_src>

<mosaic_0001>
module attributes {stable_mosaic.version = 11 : i64} {
  func.func @_conv1x1_softmax_kernel(%arg0: i32, %arg1: i32, %arg2: memref<4x4xf32, #tpu.memory_space<smem>>, %arg3: memref<4xf32, #tpu.memory_space<smem>>, %arg4: memref<1x4x2x128xf32, #tpu.memory_space<vmem>>, %arg5: memref<1x4x2x128xf32, #tpu.memory_space<vmem>>) attributes {dimension_semantics = [#tpu.dimension_semantics<parallel>, #tpu.dimension_semantics<parallel>], iteration_bounds = array<i64: 2, 1>, scalar_prefetch = 0 : i64, scratch_operands = 0 : i64, tpu.core_type = #tpu.core_type<tc>, window_params = [{transform_indices = @transform_0, window_bounds = array<i64: 4, 4>}, {transform_indices = @transform_1, window_bounds = array<i64: 4>}, {transform_indices = @transform_2, window_bounds = array<i64: 1, 4, 2, 128>}, {transform_indices = @transform_3, window_bounds = array<i64: 1, 4, 2, 128>}]} {
    %c0 = arith.constant 0 : index
    %c0_0 = arith.constant 0 : index
    %0 = memref.load %arg2[%c0, %c0_0] : memref<4x4xf32, #tpu.memory_space<smem>>
    %c0_1 = arith.constant 0 : index
    %c1 = arith.constant 1 : index
    %1 = memref.load %arg2[%c0_1, %c1] : memref<4x4xf32, #tpu.memory_space<smem>>
    %c0_2 = arith.constant 0 : index
    %c2 = arith.constant 2 : index
    %2 = memref.load %arg2[%c0_2, %c2] : memref<4x4xf32, #tpu.memory_space<smem>>
    %c0_3 = arith.constant 0 : index
    %c3 = arith.constant 3 : index
    %3 = memref.load %arg2[%c0_3, %c3] : memref<4x4xf32, #tpu.memory_space<smem>>
    %c1_4 = arith.constant 1 : index
    %c0_5 = arith.constant 0 : index
    %4 = memref.load %arg2[%c1_4, %c0_5] : memref<4x4xf32, #tpu.memory_space<smem>>
    %c1_6 = arith.constant 1 : index
    %c1_7 = arith.constant 1 : index
    %5 = memref.load %arg2[%c1_6, %c1_7] : memref<4x4xf32, #tpu.memory_space<smem>>
    %c1_8 = arith.constant 1 : index
    %c2_9 = arith.constant 2 : index
    %6 = memref.load %arg2[%c1_8, %c2_9] : memref<4x4xf32, #tpu.memory_space<smem>>
    %c1_10 = arith.constant 1 : index
    %c3_11 = arith.constant 3 : index
    %7 = memref.load %arg2[%c1_10, %c3_11] : memref<4x4xf32, #tpu.memory_space<smem>>
    %c2_12 = arith.constant 2 : index
    %c0_13 = arith.constant 0 : index
    %8 = memref.load %arg2[%c2_12, %c0_13] : memref<4x4xf32, #tpu.memory_space<smem>>
    %c2_14 = arith.constant 2 : index
    %c1_15 = arith.constant 1 : index
    %9 = memref.load %arg2[%c2_14, %c1_15] : memref<4x4xf32, #tpu.memory_space<smem>>
    %c2_16 = arith.constant 2 : index
    %c2_17 = arith.constant 2 : index
    %10 = memref.load %arg2[%c2_16, %c2_17] : memref<4x4xf32, #tpu.memory_space<smem>>
    %c2_18 = arith.constant 2 : index
    %c3_19 = arith.constant 3 : index
    %11 = memref.load %arg2[%c2_18, %c3_19] : memref<4x4xf32, #tpu.memory_space<smem>>
    %c3_20 = arith.constant 3 : index
    %c0_21 = arith.constant 0 : index
    %12 = memref.load %arg2[%c3_20, %c0_21] : memref<4x4xf32, #tpu.memory_space<smem>>
    %c3_22 = arith.constant 3 : index
    %c1_23 = arith.constant 1 : index
    %13 = memref.load %arg2[%c3_22, %c1_23] : memref<4x4xf32, #tpu.memory_space<smem>>
    %c3_24 = arith.constant 3 : index
    %c2_25 = arith.constant 2 : index
    %14 = memref.load %arg2[%c3_24, %c2_25] : memref<4x4xf32, #tpu.memory_space<smem>>
    %c3_26 = arith.constant 3 : index
    %c3_27 = arith.constant 3 : index
    %15 = memref.load %arg2[%c3_26, %c3_27] : memref<4x4xf32, #tpu.memory_space<smem>>
    %c0_28 = arith.constant 0 : index
    %16 = memref.load %arg3[%c0_28] : memref<4xf32, #tpu.memory_space<smem>>
    %c1_29 = arith.constant 1 : index
    %17 = memref.load %arg3[%c1_29] : memref<4xf32, #tpu.memory_space<smem>>
    %c2_30 = arith.constant 2 : index
    %18 = memref.load %arg3[%c2_30] : memref<4xf32, #tpu.memory_space<smem>>
    %c3_31 = arith.constant 3 : index
    %19 = memref.load %arg3[%c3_31] : memref<4xf32, #tpu.memory_space<smem>>
    %c0_i32 = arith.constant 0 : i32
    %c2_i32 = arith.constant 2 : i32
    %20 = arith.muli %c0_i32, %c2_i32 : i32
    %21 = tpu.assume_multiple %20, 2 : i32
    %c0_32 = arith.constant 0 : index
    %c0_33 = arith.constant 0 : index
    %22 = arith.index_cast %21 : i32 to index
    %c0_34 = arith.constant 0 : index
    %23 = vector.load %arg4[%c0_32, %c0_33, %22, %c0_34] : memref<1x4x2x128xf32, #tpu.memory_space<vmem>>, vector<1x1x2x128xf32>
    %24 = vector.shape_cast %23 : vector<1x1x2x128xf32> to vector<2x128xf32>
    %c0_35 = arith.constant 0 : index
    %c1_36 = arith.constant 1 : index
    %25 = arith.index_cast %21 : i32 to index
    %c0_37 = arith.constant 0 : index
    %26 = vector.load %arg4[%c0_35, %c1_36, %25, %c0_37] : memref<1x4x2x128xf32, #tpu.memory_space<vmem>>, vector<1x1x2x128xf32>
    %27 = vector.shape_cast %26 : vector<1x1x2x128xf32> to vector<2x128xf32>
    %c0_38 = arith.constant 0 : index
    %c2_39 = arith.constant 2 : index
    %28 = arith.index_cast %21 : i32 to index
    %c0_40 = arith.constant 0 : index
    %29 = vector.load %arg4[%c0_38, %c2_39, %28, %c0_40] : memref<1x4x2x128xf32, #tpu.memory_space<vmem>>, vector<1x1x2x128xf32>
    %30 = vector.shape_cast %29 : vector<1x1x2x128xf32> to vector<2x128xf32>
    %c0_41 = arith.constant 0 : index
    %c3_42 = arith.constant 3 : index
    %31 = arith.index_cast %21 : i32 to index
    %c0_43 = arith.constant 0 : index
    %32 = vector.load %arg4[%c0_41, %c3_42, %31, %c0_43] : memref<1x4x2x128xf32, #tpu.memory_space<vmem>>, vector<1x1x2x128xf32>
    %33 = vector.shape_cast %32 : vector<1x1x2x128xf32> to vector<2x128xf32>
    %34 = vector.broadcast %0 : f32 to vector<2x128xf32>
    %35 = arith.mulf %24, %34 : vector<2x128xf32>
    %36 = vector.broadcast %16 : f32 to vector<2x128xf32>
    %37 = arith.addf %35, %36 : vector<2x128xf32>
    %38 = vector.broadcast %1 : f32 to vector<2x128xf32>
    %39 = arith.mulf %27, %38 : vector<2x128xf32>
    %40 = arith.addf %37, %39 : vector<2x128xf32>
    %41 = vector.broadcast %2 : f32 to vector<2x128xf32>
    %42 = arith.mulf %30, %41 : vector<2x128xf32>
    %43 = arith.addf %40, %42 : vector<2x128xf32>
    %44 = vector.broadcast %3 : f32 to vector<2x128xf32>
    %45 = arith.mulf %33, %44 : vector<2x128xf32>
    %46 = arith.addf %43, %45 : vector<2x128xf32>
    %47 = vector.broadcast %4 : f32 to vector<2x128xf32>
    %48 = arith.mulf %24, %47 : vector<2x128xf32>
    %49 = vector.broadcast %17 : f32 to vector<2x128xf32>
    %50 = arith.addf %48, %49 : vector<2x128xf32>
    %51 = vector.broadcast %5 : f32 to vector<2x128xf32>
    %52 = arith.mulf %27, %51 : vector<2x128xf32>
    %53 = arith.addf %50, %52 : vector<2x128xf32>
    %54 = vector.broadcast %6 : f32 to vector<2x128xf32>
    %55 = arith.mulf %30, %54 : vector<2x128xf32>
    %56 = arith.addf %53, %55 : vector<2x128xf32>
    %57 = vector.broadcast %7 : f32 to vector<2x128xf32>
    %58 = arith.mulf %33, %57 : vector<2x128xf32>
    %59 = arith.addf %56, %58 : vector<2x128xf32>
    %60 = vector.broadcast %8 : f32 to vector<2x128xf32>
    %61 = arith.mulf %24, %60 : vector<2x128xf32>
    %62 = vector.broadcast %18 : f32 to vector<2x128xf32>
    %63 = arith.addf %61, %62 : vector<2x128xf32>
    %64 = vector.broadcast %9 : f32 to vector<2x128xf32>
    %65 = arith.mulf %27, %64 : vector<2x128xf32>
    %66 = arith.addf %63, %65 : vector<2x128xf32>
    %67 = vector.broadcast %10 : f32 to vector<2x128xf32>
    %68 = arith.mulf %30, %67 : vector<2x128xf32>
    %69 = arith.addf %66, %68 : vector<2x128xf32>
    %70 = vector.broadcast %11 : f32 to vector<2x128xf32>
    %71 = arith.mulf %33, %70 : vector<2x128xf32>
    %72 = arith.addf %69, %71 : vector<2x128xf32>
    %73 = vector.broadcast %12 : f32 to vector<2x128xf32>
    %74 = arith.mulf %24, %73 : vector<2x128xf32>
    %75 = vector.broadcast %19 : f32 to vector<2x128xf32>
    %76 = arith.addf %74, %75 : vector<2x128xf32>
    %77 = vector.broadcast %13 : f32 to vector<2x128xf32>
    %78 = arith.mulf %27, %77 : vector<2x128xf32>
    %79 = arith.addf %76, %78 : vector<2x128xf32>
    %80 = vector.broadcast %14 : f32 to vector<2x128xf32>
    %81 = arith.mulf %30, %80 : vector<2x128xf32>
    %82 = arith.addf %79, %81 : vector<2x128xf32>
    %83 = vector.broadcast %15 : f32 to vector<2x128xf32>
    %84 = arith.mulf %33, %83 : vector<2x128xf32>
    %85 = arith.addf %82, %84 : vector<2x128xf32>
    %86 = arith.maximumf %46, %59 : vector<2x128xf32>
    %87 = arith.maximumf %86, %72 : vector<2x128xf32>
    %88 = arith.maximumf %87, %85 : vector<2x128xf32>
    %89 = arith.subf %46, %88 : vector<2x128xf32>
    %90 = math.exp %89 : vector<2x128xf32>
    %91 = arith.subf %59, %88 : vector<2x128xf32>
    %92 = math.exp %91 : vector<2x128xf32>
    %93 = arith.subf %72, %88 : vector<2x128xf32>
    %94 = math.exp %93 : vector<2x128xf32>
    %95 = arith.subf %85, %88 : vector<2x128xf32>
    %96 = math.exp %95 : vector<2x128xf32>
    %97 = arith.addf %90, %92 : vector<2x128xf32>
    %98 = arith.addf %97, %94 : vector<2x128xf32>
    %99 = arith.addf %98, %96 : vector<2x128xf32>
    %100 = tpu.reciprocal %99 {approx = true} : vector<2x128xf32> -> vector<2x128xf32>
    %101 = arith.mulf %99, %100 : vector<2x128xf32>
    %cst = arith.constant 2.000000e+00 : f32
    %102 = vector.broadcast %cst : f32 to vector<2x128xf32>
    %103 = arith.subf %102, %101 : vector<2x128xf32>
    %104 = arith.mulf %100, %103 : vector<2x128xf32>
    %105 = arith.mulf %90, %104 : vector<2x128xf32>
    %c0_44 = arith.constant 0 : index
    %c0_45 = arith.constant 0 : index
    %106 = arith.index_cast %21 : i32 to index
    %c0_46 = arith.constant 0 : index
    %107 = vector.load %arg5[%c0_44, %c0_45, %106, %c0_46] : memref<1x4x2x128xf32, #tpu.memory_space<vmem>>, vector<1x1x2x128xf32>
    %108 = vector.shape_cast %107 : vector<1x1x2x128xf32> to vector<2x128xf32>
    %109 = vector.shape_cast %105 : vector<2x128xf32> to vector<1x1x2x128xf32>
    tpu.vector_store %arg5[%c0_44, %c0_45, %106, %c0_46], %109 {strides = array<i32>} : memref<1x4x2x128xf32, #tpu.memory_space<vmem>>, vector<1x1x2x128xf32>,
    %110 = arith.mulf %92, %104 : vector<2x128xf32>
    %c0_47 = arith.constant 0 : index
    %c1_48 = arith.constant 1 : index
    %111 = arith.index_cast %21 : i32 to index
    %c0_49 = arith.constant 0 : index
    %112 = vector.load %arg5[%c0_47, %c1_48, %111, %c0_49] : memref<1x4x2x128xf32, #tpu.memory_space<vmem>>, vector<1x1x2x128xf32>
    %113 = vector.shape_cast %112 : vector<1x1x2x128xf32> to vector<2x128xf32>
    %114 = vector.shape_cast %110 : vector<2x128xf32> to vector<1x1x2x128xf32>
    tpu.vector_store %arg5[%c0_47, %c1_48, %111, %c0_49], %114 {strides = array<i32>} : memref<1x4x2x128xf32, #tpu.memory_space<vmem>>, vector<1x1x2x128xf32>,
    %115 = arith.mulf %94, %104 : vector<2x128xf32>
    %c0_50 = arith.constant 0 : index
    %c2_51 = arith.constant 2 : index
    %116 = arith.index_cast %21 : i32 to index
    %c0_52 = arith.constant 0 : index
    %117 = vector.load %arg5[%c0_50, %c2_51, %116, %c0_52] : memref<1x4x2x128xf32, #tpu.memory_space<vmem>>, vector<1x1x2x128xf32>
    %118 = vector.shape_cast %117 : vector<1x1x2x128xf32> to vector<2x128xf32>
    %119 = vector.shape_cast %115 : vector<2x128xf32> to vector<1x1x2x128xf32>
    tpu.vector_store %arg5[%c0_50, %c2_51, %116, %c0_52], %119 {strides = array<i32>} : memref<1x4x2x128xf32, #tpu.memory_space<vmem>>, vector<1x1x2x128xf32>,
    %120 = arith.mulf %96, %104 : vector<2x128xf32>
    %c0_53 = arith.constant 0 : index
    %c3_54 = arith.constant 3 : index
    %121 = arith.index_cast %21 : i32 to index
    %c0_55 = arith.constant 0 : index
    %122 = vector.load %arg5[%c0_53, %c3_54, %121, %c0_55] : memref<1x4x2x128xf32, #tpu.memory_space<vmem>>, vector<1x1x2x128xf32>
    %123 = vector.shape_cast %122 : vector<1x1x2x128xf32> to vector<2x128xf32>
    %124 = vector.shape_cast %120 : vector<2x128xf32> to vector<1x1x2x128xf32>
    tpu.vector_store %arg5[%c0_53, %c3_54, %121, %c0_55], %124 {strides = array<i32>} : memref<1x4x2x128xf32, #tpu.memory_space<vmem>>, vector<1x1x2x128xf32>,
    %c1_i32 = arith.constant 1 : i32
    return
  }
  func.func @transform_0(%arg0: i32, %arg1: i32) -> (i32, i32) {
    %c0_i32 = arith.constant 0 : i32
    %c0_i32_0 = arith.constant 0 : i32
    %c0_i32_1 = arith.constant 0 : i32
    return %c0_i32, %c0_i32_0 : i32, i32
  }
  func.func @transform_1(%arg0: i32, %arg1: i32) -> i32 {
    %c0_i32 = arith.constant 0 : i32
    %c0_i32_0 = arith.constant 0 : i32
    return %c0_i32 : i32
  }
  func.func @transform_2(%arg0: i32, %arg1: i32) -> (i32, i32, i32, i32) {
    %c0_i32 = arith.constant 0 : i32
    %c0_i32_0 = arith.constant 0 : i32
    %c0_i32_1 = arith.constant 0 : i32
    return %arg0, %c0_i32, %arg1, %c0_i32_0 : i32, i32, i32, i32
  }
  func.func @transform_3(%arg0: i32, %arg1: i32) -> (i32, i32, i32, i32) {
    %c0_i32 = arith.constant 0 : i32
    %c0_i32_0 = arith.constant 0 : i32
    %c0_i32_1 = arith.constant 0 : i32
    return %arg0, %c0_i32, %arg1, %c0_i32_0 : i32, i32, i32, i32
  }
}

</mosaic_0001>

<llo_original>
// kernel: tpu_custom_call.1
$region0: #{tpu_custom_call.1}
  #allocation0 [shape = 'u32[]', space=smem, size = 0x4, offset = 0x4, fixed_abs, tag = 'smem constant byte address 0x4 - core index']
  #allocation1 [shape = 'u32[72,128]{1,0:T(1,128)}', space=vmem, size = 0x9000, scoped, tag = 'internal scratch']
  %s0 = inlined_call_operand.hbm [shape: f32[4,4], index: 0, kind: input, shape index: {}]
  %s1 = inlined_call_operand.hbm [shape: f32[4], index: 1, kind: input, shape index: {}]
  %s2 = inlined_call_operand.hbm [shape: f32[2,4,2,128], index: 2, kind: input, shape index: {}]
  %s3 = inlined_call_operand.hbm [shape: f32[2,4,2,128], index: 3, kind: output, shape index: {}]
  %s4 = sld [smem:[#allocation0]]
  $region57: #{tpu_custom_call.1} parent=0
    _
  %s6 = ssub.s32 1, %s4
  %s7 = scalar_select 0, %s6, %s4
  $region1: #{tpu_custom_call.1} parent=0
    #allocation2 [shape = 'u8[2048]{0}', space=smem, size = 0x800, scoped, tag = 'input window, operand 0, single buffered']
    #allocation3 [shape = 's32[2]{0}', space=sflag, size = 0x8, scoped, tag = 'scoped memory for tpu_custom_call.1']
    #allocation4 [shape = 's32[2]{0}', space=sflag, size = 0x8, scoped, tag = 'scoped memory for tpu_custom_call.1']
    #allocation5 [shape = 's32[2]{0}', space=sflag, size = 0x8, scoped, tag = 'scoped memory for tpu_custom_call.1']
    #allocation6 [shape = 'u8[512]{0}', space=smem, size = 0x200, scoped, tag = 'input window, operand 1, single buffered']
    #allocation7 [shape = 's32[1]{0}', space=sflag, size = 0x4, scoped, tag = 'scoped memory for tpu_custom_call.1']
    #allocation8 [shape = 'u8[8192]{0}', space=vmem, size = 0x2000, scoped, tag = 'input window, operand 2']
    #allocation9 [shape = 'u8[8192]{0}', space=vmem, size = 0x2000, scoped, tag = 'output window, operand 0']
    %8 = vsyncpa [#allocation5], 0
    %9 = vsyncpa [#allocation7], 0
    %10 = vsyncpa [#allocation3], 0
    %s11 = scalar_lea.sflag [#allocation3], 1
    %12 = vsyncpa %s11, 0
    %13 = vsyncpa [#allocation4], 0
    %s14 = scalar_lea.sflag [#allocation4], 1
    %15 = vsyncpa %s14, 0
    loop: start=0, step=1, limit=4
    $region2: #{tpu_custom_call.1} parent=1 // loop_pre_header
      _
    $region3: #{tpu_custom_call.1} parent=1 // loop_header
      %s17 = sphi 0, %s21
      %p18 = scmp.ge.s32.totalorder %s17, 4
      %s24 = sphi 0, %s36
      %s25 = sphi 0, %s32
      %s26 = sphi 0, %s24
      %s27 = sphi 0, %s25
      %s28 = sphi 0, %s26
      %s29 = sphi 0, %s27
      %s37 = sphi 0, %s37
      %s39 = sphi 0, %s37
      %s40 = sphi 0, %s39
      %s54 = sphi 0, %s40
      %s58 = sphi 0, %s58
      %s60 = sphi 0, %s58
      %s61 = sphi 0, %s60
      %s75 = sphi 0, %s61
      %s83 = sphi 0, %s85
      %s86 = sphi 0, %s83
      %s87 = sphi 0, %s86
      %s103 = sphi 0, %s87
      %s111 = sphi 0, %s113
      %s114 = sphi 0, %s111
      %s115 = sphi 0, %s114
      %s131 = sphi 0, %s115
    $region4: #{tpu_custom_call.1} parent=1 // loop_header_branch
      %20 = sbr.rel (%p18) target = $region8
    $region5: #{tpu_custom_call.1} parent=1 // loop_body
      %s22 = ssub.s32 %s17, 1
      %s23 = ssub.s32 %s17, 2
      %s30 = sadd.s32 1, %s25
      %p31 = scmp.ge.s32.totalorder %s30, 1
      %s32 = scalar_select %p31, 0, %s30
      %s33 = sadd.s32 1, %s24
      %s34 = scalar_select %p31, %s33, %s24
      %p35 = scmp.ge.s32.totalorder %s34, 2
      %s36 = scalar_select %p35, 0, %s34
      %s38 = sadd.s32 %s37, 1
      %p41 = scmp.eq.s32.totalorder %s17, 1
      %p42 = scmp.ne.s32.totalorder %s37, %s39
      %p43 = scmp.eq.s32.totalorder %s17, 0
      %p44 = por %p42, %p43
      %p45 = scmp.ne.s32.totalorder %s37, %s39
      %p46 = scmp.eq.s32.totalorder %s22, 1
      %p47 = por %p45, %p46
      %p48 = scmp.ne.s32.totalorder %s39, %s40
      %p49 = scmp.eq.s32.totalorder %s22, 0
      %p50 = por %p48, %p49
      %p51 = scmp.ne.s32.totalorder %s39, %s40
      %p52 = scmp.eq.s32.totalorder %s23, 1
      %p53 = por %p51, %p52
      %p55 = scmp.ne.s32.totalorder %s40, %s54
      %p56 = scmp.eq.s32.totalorder %s23, 0
      %p57 = por %p55, %p56
      %s59 = sadd.s32 %s58, 1
      %p62 = scmp.eq.s32.totalorder %s17, 1
      %p63 = scmp.ne.s32.totalorder %s58, %s60
      %p64 = scmp.eq.s32.totalorder %s17, 0
      %p65 = por %p63, %p64
      %p66 = scmp.ne.s32.totalorder %s58, %s60
      %p67 = scmp.eq.s32.totalorder %s22, 1
      %p68 = por %p66, %p67
      %p69 = scmp.ne.s32.totalorder %s60, %s61
      %p70 = scmp.eq.s32.totalorder %s22, 0
      %p71 = por %p69, %p70
      %p72 = scmp.ne.s32.totalorder %s60, %s61
      %p73 = scmp.eq.s32.totalorder %s23, 1
      %p74 = por %p72, %p73
      %p76 = scmp.ne.s32.totalorder %s61, %s75
      %p77 = scmp.eq.s32.totalorder %s23, 0
      %p78 = por %p76, %p77
      %s79 = ssub.s32 %s24, %s36
      %s80 = ssub.s32 %s25, %s32
      %s81 = sor.u32 %s79, %s80
      %p82 = scmp.eq.s32.totalorder %s81, 0
      %s84 = sadd.s32 %s83, 1
      %s85 = scalar_select %p82, %s83, %s84
      %p88 = pneg %p82
      %p89 = scmp.eq.s32.totalorder %s17, 1
      %p90 = por %p88, %p89
      %p91 = scmp.ne.s32.totalorder %s83, %s86
      %p92 = scmp.eq.s32.totalorder %s17, 0
      %p93 = por %p91, %p92
      %p94 = scmp.ne.s32.totalorder %s83, %s86
      %p95 = scmp.eq.s32.totalorder %s22, 1
      %p96 = por %p94, %p95
      %p97 = scmp.ne.s32.totalorder %s86, %s87
      %p98 = scmp.eq.s32.totalorder %s22, 0
      %p99 = por %p97, %p98
      %p100 = scmp.ne.s32.totalorder %s86, %s87
      %p101 = scmp.eq.s32.totalorder %s23, 1
      %p102 = por %p100, %p101
      %p104 = scmp.ne.s32.totalorder %s87, %s103
      %p105 = scmp.eq.s32.totalorder %s23, 0
      %p106 = por %p104, %p105
      %s107 = ssub.s32 %s24, %s36
      %s108 = ssub.s32 %s25, %s32
      %s109 = sor.u32 %s107, %s108
      %p110 = scmp.eq.s32.totalorder %s109, 0
      %s112 = sadd.s32 %s111, 1
      %s113 = scalar_select %p110, %s111, %s112
      %p116 = pneg %p110
      %p117 = scmp.eq.s32.totalorder %s17, 1
      %p118 = por %p116, %p117
      %p119 = scmp.ne.s32.totalorder %s111, %s114
      %p120 = scmp.eq.s32.totalorder %s17, 0
      %p121 = por %p119, %p120
      %p122 = scmp.ne.s32.totalorder %s111, %s114
      %p123 = scmp.eq.s32.totalorder %s22, 1
      %p124 = por %p122, %p123
      %p125 = scmp.ne.s32.totalorder %s114, %s115
      %p126 = scmp.eq.s32.totalorder %s22, 0
      %p127 = por %p125, %p126
      %p128 = scmp.ne.s32.totalorder %s114, %s115
      %p129 = scmp.eq.s32.totalorder %s23, 1
      %p130 = por %p128, %p129
      %p132 = scmp.ne.s32.totalorder %s115, %s131
      %p133 = scmp.eq.s32.totalorder %s23, 0
      %p134 = por %p132, %p133
      %p135 = scmp.le.s32.totalorder 1, %s17
      %p136 = scmp.lt.s32.totalorder %s17, 3
      %p137 = pnand %p135, %p136
      %p138 = pneg %p137
      // Predicated region
      $region9: #{tpu_custom_call.1} parent=5 // pred_check
        _
      $region10: #{tpu_custom_call.1} parent=5 // pred_check_branch
        %140 = sbr.rel (%p137) target = $region12
      $region11: #{tpu_custom_call.1} parent=5 // pred_region
        %s141 = ssub.s32 %s17, 1
        // Predicated region
        $region13: #{tpu_custom_call.1} parent=11 // pred_check
          %p142 = pneg %p50
        $region14: #{tpu_custom_call.1} parent=11 // pred_check_branch
          %144 = sbr.rel (%p142) target = $region16
        $region15: #{tpu_custom_call.1} parent=11 // pred_region
          %146 = vsyncadd [#allocation5], 0
          %s148 = sshll.u32 %s0, 4
          %s149 = int_to_ptr.hbm [resolvable:$true] %s148
          %151 = dma.hbm_to_smem %s149, 64, [#allocation2], [#allocation5]
        $region16: #{tpu_custom_call.1} parent=11 // pred_fallthru
          _
        // Predicated region
        $region17: #{tpu_custom_call.1} parent=11 // pred_check
          %p152 = pneg %p71
        $region18: #{tpu_custom_call.1} parent=11 // pred_check_branch
          %154 = sbr.rel (%p152) target = $region20
        $region19: #{tpu_custom_call.1} parent=11 // pred_region
          %156 = vsyncadd [#allocation7], 0
          %s158 = sshll.u32 %s1, 4
          %s159 = int_to_ptr.hbm [resolvable:$true] %s158
          %161 = dma.hbm_to_smem %s159, 16, [#allocation6], [#allocation7]
        $region20: #{tpu_custom_call.1} parent=11 // pred_fallthru
          _
      $region12: #{tpu_custom_call.1} parent=5 // pred_fallthru
        _
      %p162 = scmp.lt.s32.totalorder %s17, 2
      // Predicated region
      $region21: #{tpu_custom_call.1} parent=5 // pred_check
        %p163 = pneg %p162
      $region22: #{tpu_custom_call.1} parent=5 // pred_check_branch
        %165 = sbr.rel (%p163) target = $region24
      $region23: #{tpu_custom_call.1} parent=5 // pred_region
        // Predicated region
        $region25: #{tpu_custom_call.1} parent=23 // pred_check
          %p166 = pneg %p93
        $region26: #{tpu_custom_call.1} parent=23 // pred_check_branch
          %168 = sbr.rel (%p166) target = $region28
        $region27: #{tpu_custom_call.1} parent=23 // pred_region
          %s169 = sand.u32 %s83, 1
          %s170 = scalar_lea.sflag [#allocation3], %s169
          %s171 = sand.u32 %s83, 1
          %s172 = smul.addr %s171, 8
          %s173 = scalar_lea.vmem [#allocation8], %s172
          %175 = vsyncadd %s170, 0
          %s176 = smul.addr %s24, 4
          %s177 = sadd.s32 %s25, %s176
          %s178 = smul.addr %s177, 2
          %s179 = scalar_lea.hbm %s2, %s178
          %s180 = sshll.u32 %s179, 4
          %s181 = int_to_ptr.hbm [resolvable:$true] %s180
          %s182 = sshll.u32 %s173, 4
          %s183 = int_to_ptr.vmem [resolvable:$true] %s182
          %188 = dma.hbm_to_vmem [thread:$0]  %s181, 128, %s183, %s170, 32, 32, 2
        $region28: #{tpu_custom_call.1} parent=23 // pred_fallthru
          _
      $region24: #{tpu_custom_call.1} parent=5 // pred_fallthru
        _
      %p189 = scmp.le.s32.totalorder 1, %s17
      %p190 = scmp.lt.s32.totalorder %s17, 3
      %p191 = pnand %p189, %p190
      %p192 = pneg %p191
      // Predicated region
      $region29: #{tpu_custom_call.1} parent=5 // pred_check
        _
      $region30: #{tpu_custom_call.1} parent=5 // pred_check_branch
        %194 = sbr.rel (%p191) target = $region32
      $region31: #{tpu_custom_call.1} parent=5 // pred_region
        %s195 = ssub.s32 %s17, 1
        // Predicated region
        $region33: #{tpu_custom_call.1} parent=31 // pred_check
          %p196 = pneg %p50
        $region34: #{tpu_custom_call.1} parent=31 // pred_check_branch
          %198 = sbr.rel (%p196) target = $region36
        $region35: #{tpu_custom_call.1} parent=31 // pred_region
          %200 = dma.done [#allocation5], 64
        $region36: #{tpu_custom_call.1} parent=31 // pred_fallthru
          _
        // Predicated region
        $region37: #{tpu_custom_call.1} parent=31 // pred_check
          %p201 = pneg %p71
        $region38: #{tpu_custom_call.1} parent=31 // pred_check_branch
          %203 = sbr.rel (%p201) target = $region40
        $region39: #{tpu_custom_call.1} parent=31 // pred_region
          %205 = dma.done [#allocation7], 16
        $region40: #{tpu_custom_call.1} parent=31 // pred_fallthru
          _
        %s206 = sand.u32 %s86, 1
        %s207 = scalar_lea.sflag [#allocation3], %s206
        %s208 = sand.u32 %s86, 1
        %s209 = smul.addr %s208, 8
        %s210 = scalar_lea.vmem [#allocation8], %s209
        // Predicated region
        $region41: #{tpu_custom_call.1} parent=31 // pred_check
          %p211 = pneg %p99
        $region42: #{tpu_custom_call.1} parent=31 // pred_check_branch
          %213 = sbr.rel (%p211) target = $region44
        $region43: #{tpu_custom_call.1} parent=31 // pred_region
          %215 = dma.done %s207, 128
        $region44: #{tpu_custom_call.1} parent=31 // pred_fallthru
          _
        %216 = sfence
        %p217 = pneg %p50
        %p218 = pneg %p47
        %p219 = pneg %p71
        %p220 = pneg %p68
        %s221 = sand.u32 %s86, 1
        %s222 = scalar_lea.sflag [#allocation3], %s221
        %s223 = sand.u32 %s86, 1
        %s224 = smul.addr %s223, 8
        %s225 = scalar_lea.vmem [#allocation8], %s224
        %p226 = pneg %p99
        %p227 = pneg %p96
        %p228 = pneg %p127
        %p229 = pneg %p124
        %s230 = sand.u32 %s114, 1
        %s231 = scalar_lea.sflag [#allocation4], %s230
        %s232 = sand.u32 %s114, 1
        %s233 = smul.addr %s232, 8
        %s234 = scalar_lea.vmem [#allocation9], %s233
        %s235 = sld [smem:[#allocation2]]
        %s236 = sld [smem:[#allocation2 + $0x1]]
        %s237 = sld [smem:[#allocation2 + $0x2]]
        %s238 = sld [smem:[#allocation2 + $0x3]]
        %s239 = sld [smem:[#allocation2 + $0x80]]
        %s240 = sld [smem:[#allocation2 + $0x81]]
        %s241 = sld [smem:[#allocation2 + $0x82]]
        %s242 = sld [smem:[#allocation2 + $0x83]]
        %s243 = sld [smem:[#allocation2 + $0x100]]
        %s244 = sld [smem:[#allocation2 + $0x101]]
        %s245 = sld [smem:[#allocation2 + $0x102]]
        %s246 = sld [smem:[#allocation2 + $0x103]]
        %s247 = sld [smem:[#allocation2 + $0x180]]
        %s248 = sld [smem:[#allocation2 + $0x181]]
        %s249 = sld [smem:[#allocation2 + $0x182]]
        %s250 = sld [smem:[#allocation2 + $0x183]]
        %s251 = sld [smem:[#allocation6]]
        %s252 = sld [smem:[#allocation6 + $0x1]]
        %s253 = sld [smem:[#allocation6 + $0x2]]
        %s254 = sld [smem:[#allocation6 + $0x3]]
        %v255 = vld [vmem:[%s210] sm:$0x3]
        %s256 = sadd.s32 0, 2
        %s257 = scalar_lea.vmem %s210, %s256 [#allocation8]
        %v258 = vld [vmem:[%s257] sm:$0x3]
        %s259 = sadd.s32 0, 4
        %s260 = scalar_lea.vmem %s210, %s259 [#allocation8]
        %v261 = vld [vmem:[%s260] sm:$0x3]
        %s262 = sadd.s32 0, 6
        %s263 = scalar_lea.vmem %s210, %s262 [#allocation8]
        %v264 = vld [vmem:[%s263] sm:$0x3]
        %v265 = vstv %s235
        %v266 = vmul.f32 %v255, %v265
        %v267 = vstv %s251
        %v268 = vadd.f32 %v266, %v267
        %v269 = vstv %s236
        %v270 = vmul.f32 %v258, %v269
        %v271 = vadd.f32 %v268, %v270
        %v272 = vstv %s237
        %v273 = vmul.f32 %v261, %v272
        %v274 = vadd.f32 %v271, %v273
        %v275 = vstv %s238
        %v276 = vmul.f32 %v264, %v275
        %v277 = vadd.f32 %v274, %v276
        %v278 = vstv %s239
        %v279 = vmul.f32 %v255, %v278
        %v280 = vstv %s252
        %v281 = vadd.f32 %v279, %v280
        %v282 = vstv %s240
        %v283 = vmul.f32 %v258, %v282
        %v284 = vadd.f32 %v281, %v283
        %v285 = vstv %s241
        %v286 = vmul.f32 %v261, %v285
        %v287 = vadd.f32 %v284, %v286
        %v288 = vstv %s242
        %v289 = vmul.f32 %v264, %v288
        %v290 = vadd.f32 %v287, %v289
        %v291 = vstv %s243
        %v292 = vmul.f32 %v255, %v291
        %v293 = vstv %s253
        %v294 = vadd.f32 %v292, %v293
        %v295 = vstv %s244
        %v296 = vmul.f32 %v258, %v295
        %v297 = vadd.f32 %v294, %v296
        %v298 = vstv %s245
        %v299 = vmul.f32 %v261, %v298
        %v300 = vadd.f32 %v297, %v299
        %v301 = vstv %s246
        %v302 = vmul.f32 %v264, %v301
        %v303 = vadd.f32 %v300, %v302
        %v304 = vstv %s247
        %v305 = vmul.f32 %v255, %v304
        %v306 = vstv %s254
        %v307 = vadd.f32 %v305, %v306
        %v308 = vstv %s248
        %v309 = vmul.f32 %v258, %v308
        %v310 = vadd.f32 %v307, %v309
        %v311 = vstv %s249
        %v312 = vmul.f32 %v261, %v311
        %v313 = vadd.f32 %v310, %v312
        %v314 = vstv %s250
        %v315 = vmul.f32 %v264, %v314
        %v316 = vadd.f32 %v313, %v315
        %v317 = vmax.f32 %v277, %v290
        %v318 = vmax.f32 %v317, %v303
        %v319 = vmax.f32 %v318, %v316
        %v320 = vsub.f32 %v277, %v319
        %v321 = vmul.f32 %v320, 1.442695
        %v322 = vpow.pop %v321
        %v323 = vsub.f32 %v290, %v319
        %v324 = vmul.f32 %v323, 1.442695
        %v325 = vpow.pop %v324
        %v326 = vsub.f32 %v303, %v319
        %v327 = vmul.f32 %v326, 1.442695
        %v328 = vpow.pop %v327
        %v329 = vsub.f32 %v316, %v319
        %v330 = vmul.f32 %v329, 1.442695
        %v331 = vpow.pop %v330
        %v332 = vadd.f32 %v322, %v325
        %v333 = vadd.f32 %v332, %v328
        %v334 = vadd.f32 %v333, %v331
        %v335 = vrcp.pop %v334
        %v336 = vmul.f32 %v334, %v335
        %v337 = vsub.f32 2.0, %v336
        %v338 = vmul.f32 %v335, %v337
        %v339 = vmul.f32 %v322, %v338
        %340 = vst [vmem:[%s234] sm:$0x3] %v339
        %v341 = vmul.f32 %v325, %v338
        %s342 = scalar_lea.vmem %s234, %s256 [#allocation9]
        %343 = vst [vmem:[%s342] sm:$0x3] %v341
        %v344 = vmul.f32 %v328, %v338
        %s345 = scalar_lea.vmem %s234, %s259 [#allocation9]
        %346 = vst [vmem:[%s345] sm:$0x3] %v344
        %v347 = vmul.f32 %v331, %v338
        %s348 = scalar_lea.vmem %s234, %s262 [#allocation9]
        %349 = vst [vmem:[%s348] sm:$0x3] %v347
        %s350 = sand.u32 %s114, 1
        %s351 = scalar_lea.sflag [#allocation4], %s350
        %s352 = sand.u32 %s114, 1
        %s353 = smul.addr %s352, 8
        %s354 = scalar_lea.vmem [#allocation9], %s353
        // Predicated region
        $region45: #{tpu_custom_call.1} parent=31 // pred_check
          %p355 = pneg %p124
        $region46: #{tpu_custom_call.1} parent=31 // pred_check_branch
          %357 = sbr.rel (%p355) target = $region48
        $region47: #{tpu_custom_call.1} parent=31 // pred_region
          %359 = vsyncadd %s351, 0
          %s360 = smul.addr %s26, 4
          %s361 = sadd.s32 %s27, %s360
          %s362 = smul.addr %s361, 2
          %s363 = scalar_lea.hbm %s3, %s362
          %s364 = sshll.u32 %s354, 4
          %s365 = int_to_ptr.vmem [resolvable:$true] %s364
          %s366 = sshll.u32 %s363, 4
          %s367 = int_to_ptr.hbm [resolvable:$true] %s366
          %372 = dma.vmem_to_hbm [thread:$0]  %s365, 128, %s367, %s351, 32, 32, 2
        $region48: #{tpu_custom_call.1} parent=31 // pred_fallthru
          _
      $region32: #{tpu_custom_call.1} parent=5 // pred_fallthru
        _
      %p373 = scmp.le.s32.totalorder 2, %s17
      // Predicated region
      $region49: #{tpu_custom_call.1} parent=5 // pred_check
        %p374 = pneg %p373
      $region50: #{tpu_custom_call.1} parent=5 // pred_check_branch
        %376 = sbr.rel (%p374) target = $region52
      $region51: #{tpu_custom_call.1} parent=5 // pred_region
        %s377 = ssub.s32 %s17, 2
        // Predicated region
        $region53: #{tpu_custom_call.1} parent=51 // pred_check
          %p378 = pneg %p130
        $region54: #{tpu_custom_call.1} parent=51 // pred_check_branch
          %380 = sbr.rel (%p378) target = $region56
        $region55: #{tpu_custom_call.1} parent=51 // pred_region
          %s381 = sand.u32 %s115, 1
          %s382 = scalar_lea.sflag [#allocation4], %s381
          %s383 = sand.u32 %s115, 1
          %s384 = smul.addr %s383, 8
          %s385 = scalar_lea.vmem [#allocation9], %s384
          %387 = dma.done %s382, 128
        $region56: #{tpu_custom_call.1} parent=51 // pred_fallthru
          _
      $region52: #{tpu_custom_call.1} parent=5 // pred_fallthru
        _
    $region6: #{tpu_custom_call.1} parent=1 // loop_footer
      %s21 = sadd.s32 1, %s17
    $region7: #{tpu_custom_call.1} parent=1 // loop_footer_branch
      %16 = sbr.rel target = $region3
    $region8: #{tpu_custom_call.1} parent=1 // loop_exit
      _
    %388 = vsyncpa [#allocation3], 1
    %s389 = scalar_lea.sflag [#allocation3], 1
    %390 = vsyncpa %s389, 1
    %391 = vsyncpa [#allocation4], 1
    %s392 = scalar_lea.sflag [#allocation4], 1
    %393 = vsyncpa %s392, 1
    %394 = vsyncpa [#allocation5], 1
    %s395 = scalar_lea.sflag [#allocation5], 1
    %396 = vsyncpa %s395, 1
    %397 = vsyncpa [#allocation7], 1

</llo_original>
